<compile_context>
chip_gen: v7x
topology: tpu7x:2x2x1
jax: 0.10.0
libtpu: 0.0.40
codegen_flags: <defaults>
</compile_context>

<pallas_src>
import functools
import math

import jax
import jax.numpy as jnp
from jax import lax
from jax.experimental import pallas as pl
from jax.experimental.pallas import tpu as pltpu


# ----------------------------------------------------------------------------
# Generation-aware hardware queries (with safe fallbacks).
# ----------------------------------------------------------------------------
def _device_kind() -> str:
    try:
        return jax.devices()[0].device_kind.lower()
    except Exception:
        return ""


def _vmem_capacity_bytes() -> int:
    try:
        return int(pltpu.get_tpu_info().vmem_capacity_bytes)
    except Exception:
        # v7x has 64 MiB per TensorCore; v5e/v6e have 128 MiB.
        return (64 << 20) if "v7" in _device_kind() else (128 << 20)


def _mxu_m() -> int:
    """Natural output-channel tile: 256 on 256-wide MXUs (v6e/v7x), 128 otherwise."""
    kind = _device_kind()
    return 256 if ("v6" in kind or "v7" in kind) else 128


def _round_up(x: int, m: int) -> int:
    return ((x + m - 1) // m) * m


def _pick_cout_tile(c_out: int, mxu_m: int) -> int:
    """Largest MXU-friendly divisor of c_out (falls back to small divisors rather
    than a single huge c_out block when c_out is not 128/256-divisible)."""
    if c_out >= mxu_m and c_out % mxu_m == 0:
        return mxu_m
    for cand in (256, 128, 64, 32, 16, 8):
        if cand < c_out and c_out % cand == 0:
            return cand
    return c_out


def _pick_freq_tile(f_out, *, t_dim, s, c_pad, K, tco, fq, in_item, out_item, budget):
    """Largest legal output-frequency tile whose per-step VMEM need fits `budget`."""

    def vmem_need(tf):
        x_blk = 2 * s * c_pad * fq * t_dim * in_item        # resident band block (dbl-buffered)
        out_blk = 2 * tco * tf * t_dim * out_item           # double-buffered output tile
        w_blk = tco * K * c_pad * in_item                   # constant across inner axes
        b_blk = tco * 4
        xk_val = K * c_pad * tf * t_dim * in_item            # assembled matmul operand
        acc_val = tco * tf * t_dim * 4                       # f32 accumulator value
        return x_blk + out_blk + w_blk + b_blk + xk_val + acc_val

    # tf must divide f_out; if tf < f_out the output block lane width tf*T must be
    # a multiple of 128 (BlockSpec (8,128) rule for non-full trailing dims).
    cands = [d for d in range(f_out, 0, -1)
             if f_out % d == 0 and (d == f_out or (d * t_dim) % 128 == 0)]
    for tf in cands:
        need = vmem_need(tf)
        if need <= budget:
            return tf, need
    raise ValueError(
        f"SDlayer band does not fit the VMEM budget ({budget} B): smallest legal "
        f"freq tile needs {vmem_need(cands[-1])} B. Reduce tco or add halo'd "
        "input-frequency tiling.")


# ----------------------------------------------------------------------------
# Kernel: one (batch, Cout-tile, output-freq-tile) block of a (K,1)/(s,1) conv.
# ----------------------------------------------------------------------------
def _band_conv_kernel(x_ref, w_ref, b_ref, o_ref, *, kernel, stride, t_dim, tf,
                      n_f_tiles):
    """
    x_ref: (s, Cp, fq*T)   stride-split band; freq fp = fb*s + r, lanes = fb*T + t
    w_ref: (tco, K*Cp)     tap-fused weights, column index = dk*Cp + c
    b_ref: (tco, 1)        bias (float32)
    o_ref: (tco, tf*T)     output tile: output freqs [fo*tf, fo*tf+tf), all t
    """
    width = tf * t_dim
    parts = []
    for dk in range(kernel):                       # static, unrolled (K small)
        q, r = divmod(dk, stride)                  # tap dk -> (freq-block shift, phase)
        if n_f_tiles == 1:
            lo = q * t_dim                         # fully static slice
            parts.append(x_ref[r, :, lo:lo + width])
        else:
            start = pl.multiple_of(
                pl.program_id(2) * width + q * t_dim, t_dim)
            parts.append(x_ref[r, :, pl.ds(start, width)])
    # Single fused contraction over K*Cp (one MXU matmul instead of K).
    xk = parts[0] if kernel == 1 else jnp.concatenate(parts, axis=0)  # (K*Cp, tf*T)
    acc = jnp.dot(w_ref[...], xk, preferred_element_type=jnp.float32)  # (tco, tf*T)
    o_ref[...] = (acc + b_ref[...]).astype(o_ref.dtype)


def band_conv(padded, weight, bias, stride, kernel,
              compute_dtype=jnp.bfloat16, out_dtype=jnp.float32):
    """padded: (B, C, f_pad, T); weight: (Cout, C, K, 1); bias: (Cout,).

    Returns the VALID conv with stride (s, 1) as (B, Cout, Fout, T) in `out_dtype`.
    """
    B, C, f_pad, T = padded.shape
    c_out = weight.shape[0]
    s, K = stride, kernel
    assert f_pad % s == 0, "padding logic guarantees f_pad is a multiple of stride"
    fq = f_pad // s
    f_out = (f_pad - K) // s + 1
    assert f_out >= 1, "band shorter than kernel"

    in_item = jnp.dtype(compute_dtype).itemsize
    out_item = jnp.dtype(out_dtype).itemsize

    # Pad channels to a sublane-tile multiple so the in-kernel concat along the
    # contraction axis is tile-aligned (no-op for real SCNet channel widths).
    c_align = 16 if in_item < 4 else 8
    c_pad = max(_round_up(C, c_align), c_align)

    # --- host-side layout (fuses with the mandatory pad/cast into one XLA pass) ---
    xr = padded.astype(compute_dtype)
    if c_pad != C:
        xr = jnp.pad(xr, ((0, 0), (0, c_pad - C), (0, 0), (0, 0)))
    # freq fp -> (fb, r) with fp = fb*s + r; fuse (fb, T) into a lane-dense axis.
    xr = xr.reshape(B, c_pad, fq, s, T).transpose(0, 3, 1, 2, 4)
    xr = xr.reshape(B, s, c_pad, fq * T)

    wr = weight[:, :, :, 0].astype(compute_dtype)                # (Cout, C, K)
    if c_pad != C:
        wr = jnp.pad(wr, ((0, 0), (0, c_pad - C), (0, 0)))
    wr = jnp.transpose(wr, (0, 2, 1)).reshape(c_out, K * c_pad)  # col = dk*Cp + c
    br = bias.reshape(c_out, 1).astype(jnp.float32)

    # --- generation-aware tiling ---
    vmem_cap = _vmem_capacity_bytes()
    budget = int(0.70 * vmem_cap)            # ~45 MiB on v7x, ~90 MiB on v5e/v6e
    tco = _pick_cout_tile(c_out, _mxu_m())
    n_co = c_out // tco
    tf, need = _pick_freq_tile(f_out, t_dim=T, s=s, c_pad=c_pad, K=K, tco=tco,
                               fq=fq, in_item=in_item, out_item=out_item,
                               budget=budget)
    n_f = f_out // tf
    vmem_limit = int(min(0.75 * vmem_cap, max(need * 1.25, 32 << 20)))
    assert need <= vmem_limit, (need, vmem_limit)

    cost = pl.CostEstimate(
        flops=2 * B * c_out * c_pad * K * f_out * T,
        transcendentals=0,
        bytes_accessed=(B * s * c_pad * fq * T * in_item
                        + c_out * K * c_pad * in_item + c_out * 4
                        + B * c_out * f_out * T * out_item),
    )

    kern = functools.partial(_band_conv_kernel, kernel=K, stride=s, t_dim=T,
                             tf=tf, n_f_tiles=n_f)

    # Grid (B, Cout tiles, freq tiles): band block index only depends on the batch
    # axis (stays VMEM-resident across Cout/freq tiles); weights/bias only depend on
    # the Cout-tile axis (constant across the innermost freq-tile axis).
    out = pl.pallas_call(
        kern,
        out_shape=jax.ShapeDtypeStruct((B, c_out, f_out * T), out_dtype),
        grid=(B, n_co, n_f),
        in_specs=[
            pl.BlockSpec((pl.Squeezed(), s, c_pad, fq * T),
                         lambda bi, j, fo: (bi, 0, 0, 0)),
            pl.BlockSpec((tco, K * c_pad), lambda bi, j, fo: (j, 0)),
            pl.BlockSpec((tco, 1), lambda bi, j, fo: (j, 0)),
        ],
        out_specs=pl.BlockSpec((pl.Squeezed(), tco, tf * T),
                               lambda bi, j, fo: (bi, j, fo)),
        compiler_params=pltpu.CompilerParams(
            dimension_semantics=("parallel", "parallel", "parallel"),
            vmem_limit_bytes=vmem_limit,
        ),
        cost_estimate=cost,
    )(xr, wr, br)
    return out.reshape(B, c_out, f_out, T)


# ----------------------------------------------------------------------------
# SDlayer forward (band split + per-band conv), matching the PyTorch module.
# ----------------------------------------------------------------------------
class SDLayerPallas:
    """JAX/Pallas re-implementation of scnet SDlayer.forward."""

    def __init__(self, channels_in, channels_out, band_configs, key):
        self.c_in = channels_in
        self.c_out = channels_out
        self.weights, self.biases, self.strides, self.kernels = [], [], [], []
        for config in band_configs.values():
            k = config["kernel"]
            key, wk, bk = jax.random.split(key, 3)
            fan_in = channels_in * k * 1
            bound = 1.0 / math.sqrt(fan_in)
            # Same shapes as nn.Conv2d(channels_in, channels_out, (k,1), (s,1), (0,0))
            w = jax.random.uniform(wk, (channels_out, channels_in, k, 1),
                                   jnp.float32, -bound, bound)
            b = jax.random.uniform(bk, (channels_out,), jnp.float32, -bound, bound)
            self.weights.append(w)
            self.biases.append(b)
            self.strides.append(config["stride"])
            self.kernels.append(k)
        self.SR_low = band_configs["low"]["SR"]
        self.SR_mid = band_configs["mid"]["SR"]

    def _split_bounds(self, Fr):
        return [
            (0, math.ceil(Fr * self.SR_low)),
            (math.ceil(Fr * self.SR_low), math.ceil(Fr * (self.SR_low + self.SR_mid))),
            (math.ceil(Fr * (self.SR_low + self.SR_mid)), Fr),
        ]

    @staticmethod
    def _pad_band(extracted, stride, kernel):
        current_length = extracted.shape[2]
        if stride == 1:
            total_padding = kernel - stride
        else:
            total_padding = (stride - current_length % stride) % stride
        pad_left = total_padding // 2
        pad_right = total_padding - pad_left
        return jnp.pad(extracted, ((0, 0), (0, 0), (pad_left, pad_right), (0, 0)))

    def __call__(self, x, compute_dtype=jnp.bfloat16, out_dtype=jnp.float32):
        B, C, Fr, T = x.shape
        splits = self._split_bounds(Fr)
        outputs, original_lengths = [], []
        for w, b, stride, kernel, (start, end) in zip(
            self.weights, self.biases, self.strides, self.kernels, splits
        ):
            extracted = x[:, :, start:end, :]
            original_lengths.append(end - start)
            padded = self._pad_band(extracted, stride, kernel)
            outputs.append(band_conv(padded, w, b, stride, kernel,
                                     compute_dtype=compute_dtype,
                                     out_dtype=out_dtype))
        return outputs, original_lengths


def _reference_band_conv(padded, weight, bias, stride):
    """Pure-JAX reference (lax.conv on NCHW, f32 accumulation)."""
    out = lax.conv_general_dilated(
        padded, weight, window_strides=(stride, 1), padding="VALID",
        dimension_numbers=("NCHW", "OIHW", "NCHW"),
        preferred_element_type=jnp.float32,
    )
    return out + bias.astype(jnp.float32)[None, :, None, None]


if __name__ == "__main__":
    B, C_in, C_out, Fr, T = 2, 4, 8, 16, 16
    band_configs = {
        "low": {"SR": 0.25, "stride": 1, "kernel": 3},
        "mid": {"SR": 0.5, "stride": 2, "kernel": 2},
        "high": {"SR": 0.25, "stride": 4, "kernel": 4},
    }

    key = jax.random.PRNGKey(0)
    key, xk = jax.random.split(key)
    x = jax.random.normal(xk, (B, C_in, Fr, T), jnp.float32)

    layer = SDLayerPallas(C_in, C_out, band_configs, key)

    # Whole forward under one jit so the three pallas_calls (and the pad/relayout
    # passes) are compiled/overlapped together.
    fwd_bf16 = jax.jit(lambda v: layer(v, compute_dtype=jnp.bfloat16)[0])
    fwd_f32 = jax.jit(lambda v: layer(v, compute_dtype=jnp.float32)[0])

    outs_bf16 = [jax.block_until_ready(o) for o in fwd_bf16(x)]   # bf16 MXU operands
    outs_f32 = [jax.block_until_ready(o) for o in fwd_f32(x)]     # tight numeric check

    splits = layer._split_bounds(Fr)
    lengths = [end - start for (start, end) in splits]

    for i, (w, b, stride, kernel, (start, end)) in enumerate(
        zip(layer.weights, layer.biases, layer.strides, layer.kernels, splits)
    ):
        padded = SDLayerPallas._pad_band(x[:, :, start:end, :], stride, kernel)

        ref_f32 = _reference_band_conv(padded, w, b, stride)
        assert outs_f32[i].shape == ref_f32.shape, (outs_f32[i].shape, ref_f32.shape)
        assert jnp.allclose(outs_f32[i], ref_f32, atol=1e-4, rtol=1e-4), \
            f"band {i} f32 mismatch"

        # bf16-operand reference: identical operand rounding, f32 accumulation.
        ref_bf16 = _reference_band_conv(
            padded.astype(jnp.bfloat16), w.astype(jnp.bfloat16), b, stride
        )
        assert outs_bf16[i].shape == ref_bf16.shape
        assert jnp.allclose(outs_bf16[i], ref_bf16, atol=5e-3, rtol=5e-3), \
            f"band {i} bf16 mismatch"

    assert lengths == [end - start for (start, end) in splits]
    print("KERNEL_OK")
</pallas_src>

<mosaic_0001>
module attributes {stable_mosaic.version = 11 : i64} {
  func.func @_band_conv_kernel(%arg0: i32, %arg1: i32, %arg2: i32, %arg3: memref<1x4x16x16xbf16, #tpu.memory_space<vmem>>, %arg4: memref<8x64xbf16, #tpu.memory_space<vmem>>, %arg5: memref<8x1xf32, #tpu.memory_space<vmem>>, %arg6: memref<1x8x16xf32, #tpu.memory_space<vmem>>) attributes {dimension_semantics = [#tpu.dimension_semantics<parallel>, #tpu.dimension_semantics<parallel>, #tpu.dimension_semantics<parallel>], iteration_bounds = array<i64: 2, 1, 1>, scalar_prefetch = 0 : i64, scratch_operands = 0 : i64, tpu.core_type = #tpu.core_type<tc>, window_params = [{transform_indices = @transform_0, window_bounds = array<i64: 1, 4, 16, 16>}, {transform_indices = @transform_1, window_bounds = array<i64: 8, 64>}, {transform_indices = @transform_2, window_bounds = array<i64: 8, 1>}, {transform_indices = @transform_3, window_bounds = array<i64: 1, 8, 16>}]} {
    %c0 = arith.constant 0 : index
    %c0_0 = arith.constant 0 : index
    %c0_1 = arith.constant 0 : index
    %c0_2 = arith.constant 0 : index
    %0 = vector.load %arg3[%c0, %c0_0, %c0_1, %c0_2] : memref<1x4x16x16xbf16, #tpu.memory_space<vmem>>, vector<1x1x16x16xbf16>
    %1 = vector.shape_cast %0 : vector<1x1x16x16xbf16> to vector<16x16xbf16>
    %c0_3 = arith.constant 0 : index
    %c1 = arith.constant 1 : index
    %c0_4 = arith.constant 0 : index
    %c0_5 = arith.constant 0 : index
    %2 = vector.load %arg3[%c0_3, %c1, %c0_4, %c0_5] : memref<1x4x16x16xbf16, #tpu.memory_space<vmem>>, vector<1x1x16x16xbf16>
    %3 = vector.shape_cast %2 : vector<1x1x16x16xbf16> to vector<16x16xbf16>
    %c0_6 = arith.constant 0 : index
    %c2 = arith.constant 2 : index
    %c0_7 = arith.constant 0 : index
    %c0_8 = arith.constant 0 : index
    %4 = vector.load %arg3[%c0_6, %c2, %c0_7, %c0_8] : memref<1x4x16x16xbf16, #tpu.memory_space<vmem>>, vector<1x1x16x16xbf16>
    %5 = vector.shape_cast %4 : vector<1x1x16x16xbf16> to vector<16x16xbf16>
    %c0_9 = arith.constant 0 : index
    %c3 = arith.constant 3 : index
    %c0_10 = arith.constant 0 : index
    %c0_11 = arith.constant 0 : index
    %6 = vector.load %arg3[%c0_9, %c3, %c0_10, %c0_11] : memref<1x4x16x16xbf16, #tpu.memory_space<vmem>>, vector<1x1x16x16xbf16>
    %7 = vector.shape_cast %6 : vector<1x1x16x16xbf16> to vector<16x16xbf16>
    %8 = tpu.concatenate %1, %3, %5, %7 in 0 : vector<16x16xbf16>, vector<16x16xbf16>, vector<16x16xbf16>, vector<16x16xbf16> -> vector<64x16xbf16>
    %c0_12 = arith.constant 0 : index
    %c0_13 = arith.constant 0 : index
    %9 = vector.load %arg4[%c0_12, %c0_13] : memref<8x64xbf16, #tpu.memory_space<vmem>>, vector<8x64xbf16>
    %cst = arith.constant dense<0.000000e+00> : vector<8x16xf32>
    %10 = tpu.matmul %9, %8, %cst {dimension_numbers = #tpu.dot_dimension_numbers<[1], [0], [0], [1], [0, 0, 1, 1], [], []>} : vector<8x64xbf16>, vector<64x16xbf16>, vector<8x16xf32> -> vector<8x16xf32>
    %c0_14 = arith.constant 0 : index
    %c0_15 = arith.constant 0 : index
    %11 = vector.load %arg5[%c0_14, %c0_15] : memref<8x1xf32, #tpu.memory_space<vmem>>, vector<8x1xf32>
    %12 = vector.broadcast %11 : vector<8x1xf32> to vector<8x16xf32>
    %13 = arith.addf %10, %12 : vector<8x16xf32>
    %c0_16 = arith.constant 0 : index
    %c0_17 = arith.constant 0 : index
    %c0_18 = arith.constant 0 : index
    %14 = vector.load %arg6[%c0_16, %c0_17, %c0_18] : memref<1x8x16xf32, #tpu.memory_space<vmem>>, vector<1x8x16xf32>
    %15 = vector.shape_cast %14 : vector<1x8x16xf32> to vector<8x16xf32>
    %16 = vector.shape_cast %13 : vector<8x16xf32> to vector<1x8x16xf32>
    tpu.vector_store %arg6[%c0_16, %c0_17, %c0_18], %16 {strides = array<i32>} : memref<1x8x16xf32, #tpu.memory_space<vmem>>, vector<1x8x16xf32>,
    return
  }
  func.func @transform_0(%arg0: i32, %arg1: i32, %arg2: i32) -> (i32, i32, i32, i32) {
    %c0_i32 = arith.constant 0 : i32
    %c0_i32_0 = arith.constant 0 : i32
    %c0_i32_1 = arith.constant 0 : i32
    %c0_i32_2 = arith.constant 0 : i32
    return %arg0, %c0_i32, %c0_i32_0, %c0_i32_1 : i32, i32, i32, i32
  }
  func.func @transform_1(%arg0: i32, %arg1: i32, %arg2: i32) -> (i32, i32) {
    %c0_i32 = arith.constant 0 : i32
    %c0_i32_0 = arith.constant 0 : i32
    return %arg1, %c0_i32 : i32, i32
  }
  func.func @transform_2(%arg0: i32, %arg1: i32, %arg2: i32) -> (i32, i32) {
    %c0_i32 = arith.constant 0 : i32
    %c0_i32_0 = arith.constant 0 : i32
    return %arg1, %c0_i32 : i32, i32
  }
  func.func @transform_3(%arg0: i32, %arg1: i32, %arg2: i32) -> (i32, i32, i32) {
    %c0_i32 = arith.constant 0 : i32
    return %arg0, %arg1, %arg2 : i32, i32, i32
  }
}

module attributes {stable_mosaic.version = 11 : i64} {
  func.func @_band_conv_kernel(%arg0: i32, %arg1: i32, %arg2: i32, %arg3: memref<1x2x16x64xbf16, #tpu.memory_space<vmem>>, %arg4: memref<8x32xbf16, #tpu.memory_space<vmem>>, %arg5: memref<8x1xf32, #tpu.memory_space<vmem>>, %arg6: memref<1x8x64xf32, #tpu.memory_space<vmem>>) attributes {dimension_semantics = [#tpu.dimension_semantics<parallel>, #tpu.dimension_semantics<parallel>, #tpu.dimension_semantics<parallel>], iteration_bounds = array<i64: 2, 1, 1>, scalar_prefetch = 0 : i64, scratch_operands = 0 : i64, tpu.core_type = #tpu.core_type<tc>, window_params = [{transform_indices = @transform_0, window_bounds = array<i64: 1, 2, 16, 64>}, {transform_indices = @transform_1, window_bounds = array<i64: 8, 32>}, {transform_indices = @transform_2, window_bounds = array<i64: 8, 1>}, {transform_indices = @transform_3, window_bounds = array<i64: 1, 8, 64>}]} {
    %c0 = arith.constant 0 : index
    %c0_0 = arith.constant 0 : index
    %c0_1 = arith.constant 0 : index
    %c0_2 = arith.constant 0 : index
    %0 = vector.load %arg3[%c0, %c0_0, %c0_1, %c0_2] : memref<1x2x16x64xbf16, #tpu.memory_space<vmem>>, vector<1x1x16x64xbf16>
    %1 = vector.shape_cast %0 : vector<1x1x16x64xbf16> to vector<16x64xbf16>
    %c0_3 = arith.constant 0 : index
    %c1 = arith.constant 1 : index
    %c0_4 = arith.constant 0 : index
    %c0_5 = arith.constant 0 : index
    %2 = vector.load %arg3[%c0_3, %c1, %c0_4, %c0_5] : memref<1x2x16x64xbf16, #tpu.memory_space<vmem>>, vector<1x1x16x64xbf16>
    %3 = vector.shape_cast %2 : vector<1x1x16x64xbf16> to vector<16x64xbf16>
    %4 = tpu.concatenate %1, %3 in 0 : vector<16x64xbf16>, vector<16x64xbf16> -> vector<32x64xbf16>
    %c0_6 = arith.constant 0 : index
    %c0_7 = arith.constant 0 : index
    %5 = vector.load %arg4[%c0_6, %c0_7] : memref<8x32xbf16, #tpu.memory_space<vmem>>, vector<8x32xbf16>
    %cst = arith.constant dense<0.000000e+00> : vector<8x64xf32>
    %6 = tpu.matmul %5, %4, %cst {dimension_numbers = #tpu.dot_dimension_numbers<[1], [0], [0], [1], [0, 0, 1, 1], [], []>} : vector<8x32xbf16>, vector<32x64xbf16>, vector<8x64xf32> -> vector<8x64xf32>
    %c0_8 = arith.constant 0 : index
    %c0_9 = arith.constant 0 : index
    %7 = vector.load %arg5[%c0_8, %c0_9] : memref<8x1xf32, #tpu.memory_space<vmem>>, vector<8x1xf32>
    %8 = vector.broadcast %7 : vector<8x1xf32> to vector<8x64xf32>
    %9 = arith.addf %6, %8 : vector<8x64xf32>
    %c0_10 = arith.constant 0 : index
    %c0_11 = arith.constant 0 : index
    %c0_12 = arith.constant 0 : index
    %10 = vector.load %arg6[%c0_10, %c0_11, %c0_12] : memref<1x8x64xf32, #tpu.memory_space<vmem>>, vector<1x8x64xf32>
    %11 = vector.shape_cast %10 : vector<1x8x64xf32> to vector<8x64xf32>
    %12 = vector.shape_cast %9 : vector<8x64xf32> to vector<1x8x64xf32>
    tpu.vector_store %arg6[%c0_10, %c0_11, %c0_12], %12 {strides = array<i32>} : memref<1x8x64xf32, #tpu.memory_space<vmem>>, vector<1x8x64xf32>,
    return
  }
  func.func @transform_0(%arg0: i32, %arg1: i32, %arg2: i32) -> (i32, i32, i32, i32) {
    %c0_i32 = arith.constant 0 : i32
    %c0_i32_0 = arith.constant 0 : i32
    %c0_i32_1 = arith.constant 0 : i32
    %c0_i32_2 = arith.constant 0 : i32
    return %arg0, %c0_i32, %c0_i32_0, %c0_i32_1 : i32, i32, i32, i32
  }
  func.func @transform_1(%arg0: i32, %arg1: i32, %arg2: i32) -> (i32, i32) {
    %c0_i32 = arith.constant 0 : i32
    %c0_i32_0 = arith.constant 0 : i32
    return %arg1, %c0_i32 : i32, i32
  }
  func.func @transform_2(%arg0: i32, %arg1: i32, %arg2: i32) -> (i32, i32) {
    %c0_i32 = arith.constant 0 : i32
    %c0_i32_0 = arith.constant 0 : i32
    return %arg1, %c0_i32 : i32, i32
  }
  func.func @transform_3(%arg0: i32, %arg1: i32, %arg2: i32) -> (i32, i32, i32) {
    %c0_i32 = arith.constant 0 : i32
    return %arg0, %arg1, %arg2 : i32, i32, i32
  }
}

module attributes {stable_mosaic.version = 11 : i64} {
  func.func @_band_conv_kernel(%arg0: i32, %arg1: i32, %arg2: i32, %arg3: memref<1x1x16x96xbf16, #tpu.memory_space<vmem>>, %arg4: memref<8x48xbf16, #tpu.memory_space<vmem>>, %arg5: memref<8x1xf32, #tpu.memory_space<vmem>>, %arg6: memref<1x8x64xf32, #tpu.memory_space<vmem>>) attributes {dimension_semantics = [#tpu.dimension_semantics<parallel>, #tpu.dimension_semantics<parallel>, #tpu.dimension_semantics<parallel>], iteration_bounds = array<i64: 2, 1, 1>, scalar_prefetch = 0 : i64, scratch_operands = 0 : i64, tpu.core_type = #tpu.core_type<tc>, window_params = [{transform_indices = @transform_0, window_bounds = array<i64: 1, 1, 16, 96>}, {transform_indices = @transform_1, window_bounds = array<i64: 8, 48>}, {transform_indices = @transform_2, window_bounds = array<i64: 8, 1>}, {transform_indices = @transform_3, window_bounds = array<i64: 1, 8, 64>}]} {
    %c0 = arith.constant 0 : index
    %c0_0 = arith.constant 0 : index
    %c0_1 = arith.constant 0 : index
    %c0_2 = arith.constant 0 : index
    %0 = vector.load %arg3[%c0, %c0_0, %c0_1, %c0_2] : memref<1x1x16x96xbf16, #tpu.memory_space<vmem>>, vector<1x1x16x64xbf16>
    %1 = vector.shape_cast %0 : vector<1x1x16x64xbf16> to vector<16x64xbf16>
    %c0_3 = arith.constant 0 : index
    %c0_4 = arith.constant 0 : index
    %c0_5 = arith.constant 0 : index
    %c16 = arith.constant 16 : index
    %2 = vector.load %arg3[%c0_3, %c0_4, %c0_5, %c16] : memref<1x1x16x96xbf16, #tpu.memory_space<vmem>>, vector<1x1x16x64xbf16>
    %3 = vector.shape_cast %2 : vector<1x1x16x64xbf16> to vector<16x64xbf16>
    %c0_6 = arith.constant 0 : index
    %c0_7 = arith.constant 0 : index
    %c0_8 = arith.constant 0 : index
    %c32 = arith.constant 32 : index
    %4 = vector.load %arg3[%c0_6, %c0_7, %c0_8, %c32] : memref<1x1x16x96xbf16, #tpu.memory_space<vmem>>, vector<1x1x16x64xbf16>
    %5 = vector.shape_cast %4 : vector<1x1x16x64xbf16> to vector<16x64xbf16>
    %6 = tpu.concatenate %1, %3, %5 in 0 : vector<16x64xbf16>, vector<16x64xbf16>, vector<16x64xbf16> -> vector<48x64xbf16>
    %c0_9 = arith.constant 0 : index
    %c0_10 = arith.constant 0 : index
    %7 = vector.load %arg4[%c0_9, %c0_10] : memref<8x48xbf16, #tpu.memory_space<vmem>>, vector<8x48xbf16>
    %cst = arith.constant dense<0.000000e+00> : vector<8x64xf32>
    %8 = tpu.matmul %7, %6, %cst {dimension_numbers = #tpu.dot_dimension_numbers<[1], [0], [0], [1], [0, 0, 1, 1], [], []>} : vector<8x48xbf16>, vector<48x64xbf16>, vector<8x64xf32> -> vector<8x64xf32>
    %c0_11 = arith.constant 0 : index
    %c0_12 = arith.constant 0 : index
    %9 = vector.load %arg5[%c0_11, %c0_12] : memref<8x1xf32, #tpu.memory_space<vmem>>, vector<8x1xf32>
    %10 = vector.broadcast %9 : vector<8x1xf32> to vector<8x64xf32>
    %11 = arith.addf %8, %10 : vector<8x64xf32>
    %c0_13 = arith.constant 0 : index
    %c0_14 = arith.constant 0 : index
    %c0_15 = arith.constant 0 : index
    %12 = vector.load %arg6[%c0_13, %c0_14, %c0_15] : memref<1x8x64xf32, #tpu.memory_space<vmem>>, vector<1x8x64xf32>
    %13 = vector.shape_cast %12 : vector<1x8x64xf32> to vector<8x64xf32>
    %14 = vector.shape_cast %11 : vector<8x64xf32> to vector<1x8x64xf32>
    tpu.vector_store %arg6[%c0_13, %c0_14, %c0_15], %14 {strides = array<i32>} : memref<1x8x64xf32, #tpu.memory_space<vmem>>, vector<1x8x64xf32>,
    return
  }
  func.func @transform_0(%arg0: i32, %arg1: i32, %arg2: i32) -> (i32, i32, i32, i32) {
    %c0_i32 = arith.constant 0 : i32
    %c0_i32_0 = arith.constant 0 : i32
    %c0_i32_1 = arith.constant 0 : i32
    %c0_i32_2 = arith.constant 0 : i32
    return %arg0, %c0_i32, %c0_i32_0, %c0_i32_1 : i32, i32, i32, i32
  }
  func.func @transform_1(%arg0: i32, %arg1: i32, %arg2: i32) -> (i32, i32) {
    %c0_i32 = arith.constant 0 : i32
    %c0_i32_0 = arith.constant 0 : i32
    return %arg1, %c0_i32 : i32, i32
  }
  func.func @transform_2(%arg0: i32, %arg1: i32, %arg2: i32) -> (i32, i32) {
    %c0_i32 = arith.constant 0 : i32
    %c0_i32_0 = arith.constant 0 : i32
    return %arg1, %c0_i32 : i32, i32
  }
  func.func @transform_3(%arg0: i32, %arg1: i32, %arg2: i32) -> (i32, i32, i32) {
    %c0_i32 = arith.constant 0 : i32
    return %arg0, %arg1, %arg2 : i32, i32, i32
  }
}

</mosaic_0001>

<llo_original>
// kernel: _lambda_.5
$region0: #{_lambda_.5}
  #allocation0 [shape = 'u32[]', space=smem, size = 0x4, offset = 0x4, fixed_abs, tag = 'smem constant byte address 0x4 - core index']
  #allocation1 [shape = 'u32[144,128]{1,0:T(1,128)}', space=vmem, size = 0x12000, scoped, tag = 'internal scratch']
  %s0 = inlined_call_operand.vmem [shape: bf16[2,4,16,16], index: 0, kind: input, shape index: {}]
  %s1 = inlined_call_operand.vmem [shape: bf16[8,64], index: 1, kind: input, shape index: {}]
  %s2 = inlined_call_operand.vmem [shape: f32[8,1], index: 2, kind: input, shape index: {}]
  %s3 = inlined_call_operand.hbm [shape: f32[2,8,16], index: 3, kind: output, shape index: {}]
  %s4 = sld [smem:[#allocation0]]
  $region45: #{_lambda_.5} parent=0
    _
  %s6 = ssub.s32 1, %s4
  %s7 = scalar_select 0, %s6, %s4
  $region1: #{_lambda_.5} parent=0
    #allocation2 [shape = 'u8[8192]{0}', space=vmem, size = 0x2000, scoped, tag = 'output window, operand 0']
    #allocation3 [shape = 's32[2]{0}', space=sflag, size = 0x8, scoped, tag = 'scoped memory for _lambda_.5']
    %8 = vsyncpa [#allocation3], 0
    %s9 = scalar_lea.sflag [#allocation3], 1
    %10 = vsyncpa %s9, 0
    loop: start=0, step=1, limit=4
    $region2: #{_lambda_.5} parent=1 // loop_pre_header
      _
    $region3: #{_lambda_.5} parent=1 // loop_header
      %s12 = sphi 0, %s16
      %p13 = scmp.ge.s32.totalorder %s12, 4
      %s19 = sphi 0, %s38
      %s20 = sphi 0, %s34
      %s21 = sphi 0, %s30
      %s22 = sphi 0, %s19
      %s23 = sphi 0, %s20
      %s24 = sphi 0, %s21
      %s25 = sphi 0, %s22
      %s26 = sphi 0, %s23
      %s27 = sphi 0, %s24
      %s41 = sphi 0, %s43
      %s44 = sphi 0, %s41
      %s45 = sphi 0, %s44
      %s61 = sphi 0, %s45
      %s67 = sphi 0, %s69
      %s70 = sphi 0, %s67
      %s71 = sphi 0, %s70
      %s87 = sphi 0, %s71
      %s93 = sphi 0, %s95
      %s96 = sphi 0, %s93
      %s97 = sphi 0, %s96
      %s113 = sphi 0, %s97
      %s123 = sphi 0, %s125
      %s126 = sphi 0, %s123
      %s127 = sphi 0, %s126
      %s143 = sphi 0, %s127
    $region4: #{_lambda_.5} parent=1 // loop_header_branch
      %15 = sbr.rel (%p13) target = $region8
    $region5: #{_lambda_.5} parent=1 // loop_body
      %s17 = ssub.s32 %s12, 1
      %s18 = ssub.s32 %s12, 2
      %s28 = sadd.s32 1, %s21
      %p29 = scmp.ge.s32.totalorder %s28, 1
      %s30 = scalar_select %p29, 0, %s28
      %s31 = sadd.s32 1, %s20
      %s32 = scalar_select %p29, %s31, %s20
      %p33 = scmp.ge.s32.totalorder %s32, 1
      %s34 = scalar_select %p33, 0, %s32
      %s35 = sadd.s32 1, %s19
      %s36 = scalar_select %p33, %s35, %s19
      %p37 = scmp.ge.s32.totalorder %s36, 2
      %s38 = scalar_select %p37, 0, %s36
      %s39 = ssub.s32 %s19, %s38
      %p40 = scmp.eq.s32.totalorder %s39, 0
      %s42 = sadd.s32 %s41, 1
      %s43 = scalar_select %p40, %s41, %s42
      %p46 = pneg %p40
      %p47 = scmp.eq.s32.totalorder %s12, 1
      %p48 = por %p46, %p47
      %p49 = scmp.ne.s32.totalorder %s41, %s44
      %p50 = scmp.eq.s32.totalorder %s12, 0
      %p51 = por %p49, %p50
      %p52 = scmp.ne.s32.totalorder %s41, %s44
      %p53 = scmp.eq.s32.totalorder %s17, 1
      %p54 = por %p52, %p53
      %p55 = scmp.ne.s32.totalorder %s44, %s45
      %p56 = scmp.eq.s32.totalorder %s17, 0
      %p57 = por %p55, %p56
      %p58 = scmp.ne.s32.totalorder %s44, %s45
      %p59 = scmp.eq.s32.totalorder %s18, 1
      %p60 = por %p58, %p59
      %p62 = scmp.ne.s32.totalorder %s45, %s61
      %p63 = scmp.eq.s32.totalorder %s18, 0
      %p64 = por %p62, %p63
      %s65 = ssub.s32 %s20, %s34
      %p66 = scmp.eq.s32.totalorder %s65, 0
      %s68 = sadd.s32 %s67, 1
      %s69 = scalar_select %p66, %s67, %s68
      %p72 = pneg %p66
      %p73 = scmp.eq.s32.totalorder %s12, 1
      %p74 = por %p72, %p73
      %p75 = scmp.ne.s32.totalorder %s67, %s70
      %p76 = scmp.eq.s32.totalorder %s12, 0
      %p77 = por %p75, %p76
      %p78 = scmp.ne.s32.totalorder %s67, %s70
      %p79 = scmp.eq.s32.totalorder %s17, 1
      %p80 = por %p78, %p79
      %p81 = scmp.ne.s32.totalorder %s70, %s71
      %p82 = scmp.eq.s32.totalorder %s17, 0
      %p83 = por %p81, %p82
      %p84 = scmp.ne.s32.totalorder %s70, %s71
      %p85 = scmp.eq.s32.totalorder %s18, 1
      %p86 = por %p84, %p85
      %p88 = scmp.ne.s32.totalorder %s71, %s87
      %p89 = scmp.eq.s32.totalorder %s18, 0
      %p90 = por %p88, %p89
      %s91 = ssub.s32 %s20, %s34
      %p92 = scmp.eq.s32.totalorder %s91, 0
      %s94 = sadd.s32 %s93, 1
      %s95 = scalar_select %p92, %s93, %s94
      %p98 = pneg %p92
      %p99 = scmp.eq.s32.totalorder %s12, 1
      %p100 = por %p98, %p99
      %p101 = scmp.ne.s32.totalorder %s93, %s96
      %p102 = scmp.eq.s32.totalorder %s12, 0
      %p103 = por %p101, %p102
      %p104 = scmp.ne.s32.totalorder %s93, %s96
      %p105 = scmp.eq.s32.totalorder %s17, 1
      %p106 = por %p104, %p105
      %p107 = scmp.ne.s32.totalorder %s96, %s97
      %p108 = scmp.eq.s32.totalorder %s17, 0
      %p109 = por %p107, %p108
      %p110 = scmp.ne.s32.totalorder %s96, %s97
      %p111 = scmp.eq.s32.totalorder %s18, 1
      %p112 = por %p110, %p111
      %p114 = scmp.ne.s32.totalorder %s97, %s113
      %p115 = scmp.eq.s32.totalorder %s18, 0
      %p116 = por %p114, %p115
      %s117 = ssub.s32 %s19, %s38
      %s118 = ssub.s32 %s20, %s34
      %s119 = sor.u32 %s117, %s118
      %s120 = ssub.s32 %s21, %s30
      %s121 = sor.u32 %s119, %s120
      %p122 = scmp.eq.s32.totalorder %s121, 0
      %s124 = sadd.s32 %s123, 1
      %s125 = scalar_select %p122, %s123, %s124
      %p128 = pneg %p122
      %p129 = scmp.eq.s32.totalorder %s12, 1
      %p130 = por %p128, %p129
      %p131 = scmp.ne.s32.totalorder %s123, %s126
      %p132 = scmp.eq.s32.totalorder %s12, 0
      %p133 = por %p131, %p132
      %p134 = scmp.ne.s32.totalorder %s123, %s126
      %p135 = scmp.eq.s32.totalorder %s17, 1
      %p136 = por %p134, %p135
      %p137 = scmp.ne.s32.totalorder %s126, %s127
      %p138 = scmp.eq.s32.totalorder %s17, 0
      %p139 = por %p137, %p138
      %p140 = scmp.ne.s32.totalorder %s126, %s127
      %p141 = scmp.eq.s32.totalorder %s18, 1
      %p142 = por %p140, %p141
      %p144 = scmp.ne.s32.totalorder %s127, %s143
      %p145 = scmp.eq.s32.totalorder %s18, 0
      %p146 = por %p144, %p145
      %p147 = scmp.le.s32.totalorder 1, %s12
      %p148 = scmp.lt.s32.totalorder %s12, 3
      %p149 = pnand %p147, %p148
      %p150 = pneg %p149
      // Predicated region
      $region9: #{_lambda_.5} parent=5 // pred_check
        _
      $region10: #{_lambda_.5} parent=5 // pred_check_branch
        %152 = sbr.rel (%p149) target = $region12
      $region11: #{_lambda_.5} parent=5 // pred_region
        %s153 = ssub.s32 %s12, 1
        // Predicated region
        $region13: #{_lambda_.5} parent=11 // pred_check
          %p154 = pneg %p83
        $region14: #{_lambda_.5} parent=11 // pred_check_branch
          %156 = sbr.rel (%p154) target = $region16
        $region15: #{_lambda_.5} parent=11 // pred_region
          %p157 = scmp.lt.s32.totalorder %s23, 0
          %s158 = scalar_select %p157, %s23, 0
          %s159 = smul.addr %s158, 4
          %s160 = scalar_lea.vmem %s1, %s159
        $region16: #{_lambda_.5} parent=11 // pred_fallthru
          _
        // Predicated region
        $region17: #{_lambda_.5} parent=11 // pred_check
          %p161 = pneg %p109
        $region18: #{_lambda_.5} parent=11 // pred_check_branch
          %163 = sbr.rel (%p161) target = $region20
        $region19: #{_lambda_.5} parent=11 // pred_region
          %p164 = scmp.lt.s32.totalorder %s23, 0
          %s165 = scalar_select %p164, %s23, 0
          %s166 = smul.addr %s165, 8
          %s167 = scalar_lea.vmem %s2, %s166
        $region20: #{_lambda_.5} parent=11 // pred_fallthru
          _
      $region12: #{_lambda_.5} parent=5 // pred_fallthru
        _
      %p168 = scmp.lt.s32.totalorder %s12, 2
      // Predicated region
      $region21: #{_lambda_.5} parent=5 // pred_check
        %p169 = pneg %p168
      $region22: #{_lambda_.5} parent=5 // pred_check_branch
        %171 = sbr.rel (%p169) target = $region24
      $region23: #{_lambda_.5} parent=5 // pred_region
        // Predicated region
        $region25: #{_lambda_.5} parent=23 // pred_check
          %p172 = pneg %p51
        $region26: #{_lambda_.5} parent=23 // pred_check_branch
          %174 = sbr.rel (%p172) target = $region28
        $region27: #{_lambda_.5} parent=23 // pred_region
          %p175 = scmp.lt.s32.totalorder %s19, 1
          %s176 = scalar_select %p175, %s19, 1
          %s177 = smul.addr %s176, 8
          %s178 = smul.addr %s177, 4
          %s179 = scalar_lea.vmem %s0, %s178
        $region28: #{_lambda_.5} parent=23 // pred_fallthru
          _
      $region24: #{_lambda_.5} parent=5 // pred_fallthru
        _
      %p180 = scmp.le.s32.totalorder 1, %s12
      %p181 = scmp.lt.s32.totalorder %s12, 3
      %p182 = pnand %p180, %p181
      %p183 = pneg %p182
      // Predicated region
      $region29: #{_lambda_.5} parent=5 // pred_check
        _
      $region30: #{_lambda_.5} parent=5 // pred_check_branch
        %185 = sbr.rel (%p182) target = $region32
      $region31: #{_lambda_.5} parent=5 // pred_region
        %s186 = ssub.s32 %s12, 1
        %p187 = scmp.lt.s32.totalorder %s22, 1
        %s188 = scalar_select %p187, %s22, 1
        %s189 = smul.addr %s188, 8
        %s190 = smul.addr %s189, 4
        %s191 = scalar_lea.vmem %s0, %s190
        %p192 = pneg %p57
        %p193 = pneg %p54
        %p194 = scmp.lt.s32.totalorder %s23, 0
        %s195 = scalar_select %p194, %s23, 0
        %s196 = smul.addr %s195, 4
        %s197 = scalar_lea.vmem %s1, %s196
        %p198 = pneg %p83
        %p199 = pneg %p80
        %p200 = scmp.lt.s32.totalorder %s23, 0
        %s201 = scalar_select %p200, %s23, 0
        %s202 = smul.addr %s201, 8
        %s203 = scalar_lea.vmem %s2, %s202
        %p204 = pneg %p109
        %p205 = pneg %p106
        %p206 = pneg %p139
        %p207 = pneg %p136
        %s208 = sand.u32 %s126, 1
        %s209 = scalar_lea.sflag [#allocation3], %s208
        %s210 = sand.u32 %s126, 1
        %s211 = smul.addr %s210, 8
        %s212 = scalar_lea.vmem [#allocation2], %s211
        %p213 = scmp.lt.s32.totalorder %s22, 1
        %s214 = scalar_select %p213, %s22, 1
        %s215 = smul.addr %s214, 8
        %s216 = smul.addr %s215, 4
        %s217 = scalar_lea.vmem %s0, %s216
        %p218 = scmp.lt.s32.totalorder %s23, 0
        %s219 = scalar_select %p218, %s23, 0
        %s220 = smul.addr %s219, 4
        %s221 = scalar_lea.vmem %s1, %s220
        %p222 = scmp.lt.s32.totalorder %s23, 0
        %s223 = scalar_select %p222, %s23, 0
        %s224 = smul.addr %s223, 8
        %s225 = scalar_lea.vmem %s2, %s224
        %v227 = vld [vmem:[%s217] sm:$0xf]
        %v228 = vld [vmem:[%s217 + $0x4] sm:$0xf]
        %s229 = scalar_lea.vmem %s217, 8
        %v230 = vld [vmem:[%s229] sm:$0xf]
        %v231 = vld [vmem:[%s229 + $0x4] sm:$0xf]
        %s232 = scalar_lea.vmem %s217, 16
        %v233 = vld [vmem:[%s232] sm:$0xf]
        %v234 = vld [vmem:[%s232 + $0x4] sm:$0xf]
        %s235 = scalar_lea.vmem %s217, 24
        %v236 = vld [vmem:[%s235] sm:$0xf]
        %v237 = vld [vmem:[%s235 + $0x4] sm:$0xf]
        %v240 = vunpack.c.l.b16 %v227
        %v241 = vunpack.c.l.b16 %v228
        %v242 = vpack.c.b16 %v241, %v240
        %v246 = vunpack.c.l.b16 %v230
        %v247 = vunpack.c.l.b16 %v231
        %v248 = vpack.c.b16 %v247, %v246
        %v252 = vunpack.c.l.b16 %v233
        %v253 = vunpack.c.l.b16 %v234
        %v254 = vpack.c.b16 %v253, %v252
        %v258 = vunpack.c.l.b16 %v236
        %v259 = vunpack.c.l.b16 %v237
        %v260 = vpack.c.b16 %v259, %v258
        %v262 = vld [vmem:[%s221] sm:$0xf]
        %v263 = vld [vmem:[%s225] sm:$0xff]
        %265 = vset.pattern.permute.xlu0 0
        %266 = vperm.xlu0 %265, %v263
        %v267 = vpop.permute.xlu0 %266
        %vm269 = vcmask 523264
        %v271 = vsel %vm269, %v262, 0
        %273 = vmatprep.subr.bf16.mxu0 0
        %274 = vmatpush1.bf16.msra.mxu0 %v242
        %275 = vmatprep.subr.bf16.mxu0 0
        %276 = vmatpush1.bf16.msra.mxu0 %v248
        %277 = vmatprep.subr.bf16.mxu0 0
        %278 = vmatpush1.bf16.msra.mxu0 %v254
        %279 = vmatprep.subr.bf16.mxu0 0
        %280 = vmatpush1.bf16.msra.mxu0 %v260
        %281 = vmatprep.subr.bf16.mxu0 0
        %282 = vmatpush1.bf16.msra.mxu0 0
        %283 = vmatprep.subr.bf16.mxu0 0
        %284 = vmatpush1.bf16.msra.mxu0 0
        %285 = vmatprep.subr.bf16.mxu0 0
        %286 = vmatpush1.bf16.msra.mxu0 0
        %287 = vmatprep.subr.bf16.mxu0 0
        %288 = vmatpush1.bf16.msra.mxu0 0
        %289 = vmatprep.subr.bf16.mxu0 0
        %290 = vmatpush1.bf16.msra.mxu0 0
        %291 = vmatprep.subr.bf16.mxu0 0
        %292 = vmatpush1.bf16.msra.mxu0 0
        %293 = vmatprep.subr.bf16.mxu0 0
        %294 = vmatpush1.bf16.msra.mxu0 0
        %295 = vmatprep.subr.bf16.mxu0 0
        %296 = vmatpush1.bf16.msra.mxu0 0
        %297 = vmatprep.subr.bf16.mxu0 0
        %298 = vmatpush1.bf16.msra.mxu0 0
        %299 = vmatprep.subr.bf16.mxu0 0
        %300 = vmatpush1.bf16.msra.mxu0 0
        %301 = vmatprep.subr.bf16.mxu0 0
        %302 = vmatpush1.bf16.msra.mxu0 0
        %303 = vmatprep.subr.bf16.mxu0 0
        %304 = vmatpush1.bf16.msra.mxu0 0
        %305 = vmatprep.mubr.bf16.mxu0 0
        %306 = vmatmul.mubr.bf16.gmra.mrb[0].mxu0 %v271
        %v307 = vpop.f32.mrb[0].mxu0
        %v308 = vadd.f32 %v267, %v307
        %v309 = vpop.f32.mrb[0].mxu0
        %v310 = vpop.f32.mrb[0].mxu0
        %v311 = vpop.f32.mrb[0].mxu0
        %312 = vdwg.mxu0
        %vm313 = vcmask 130048
        %314 = vst.msk [vmem:[%s212] sm:$0xff] %vm313, %v308
        %s315 = sand.u32 %s126, 1
        %s316 = scalar_lea.sflag [#allocation3], %s315
        %s317 = sand.u32 %s126, 1
        %s318 = smul.addr %s317, 8
        %s319 = scalar_lea.vmem [#allocation2], %s318
        // Predicated region
        $region33: #{_lambda_.5} parent=31 // pred_check
          %p320 = pneg %p136
        $region34: #{_lambda_.5} parent=31 // pred_check_branch
          %322 = sbr.rel (%p320) target = $region36
        $region35: #{_lambda_.5} parent=31 // pred_region
          %s324 = ssub.s32 128, 128
          %325 = vsyncadd %s316, %s324
          %s326 = sadd.s32 %s24, %s23
          %s327 = sadd.s32 %s326, %s22
          %s328 = smul.addr %s327, 128
          %s329 = scalar_lea.hbm %s3, %s328
          %s331 = sshll.u32 %s319, 4
          %s332 = int_to_ptr.vmem [resolvable:$true] %s331
          %334 = dma.vmem_to_hbm [thread:$0]  %s332, 128, %s329, %s316
        $region36: #{_lambda_.5} parent=31 // pred_fallthru
          _
      $region32: #{_lambda_.5} parent=5 // pred_fallthru
        _
      %p335 = scmp.le.s32.totalorder 2, %s12
      // Predicated region
      $region37: #{_lambda_.5} parent=5 // pred_check
        %p336 = pneg %p335
      $region38: #{_lambda_.5} parent=5 // pred_check_branch
        %338 = sbr.rel (%p336) target = $region40
      $region39: #{_lambda_.5} parent=5 // pred_region
        %s339 = ssub.s32 %s12, 2
        // Predicated region
        $region41: #{_lambda_.5} parent=39 // pred_check
          %p340 = pneg %p142
        $region42: #{_lambda_.5} parent=39 // pred_check_branch
          %342 = sbr.rel (%p340) target = $region44
        $region43: #{_lambda_.5} parent=39 // pred_region
          %s343 = sand.u32 %s127, 1
          %s344 = scalar_lea.sflag [#allocation3], %s343
          %s345 = sand.u32 %s127, 1
          %s346 = smul.addr %s345, 8
          %s347 = scalar_lea.vmem [#allocation2], %s346
          %348 = dma.done %s344, 128
        $region44: #{_lambda_.5} parent=39 // pred_fallthru
          _
      $region40: #{_lambda_.5} parent=5 // pred_fallthru
        _
    $region6: #{_lambda_.5} parent=1 // loop_footer
      %s16 = sadd.s32 1, %s12
    $region7: #{_lambda_.5} parent=1 // loop_footer_branch
      %11 = sbr.rel target = $region3
    $region8: #{_lambda_.5} parent=1 // loop_exit
      _
    %349 = vsyncpa [#allocation3], 1
    %s350 = scalar_lea.sflag [#allocation3], 1
    %351 = vsyncpa %s350, 1

// kernel: _lambda_.4
$region0: #{_lambda_.4}
  #allocation0 [shape = 'u32[]', space=smem, size = 0x4, offset = 0x4, fixed_abs, tag = 'smem constant byte address 0x4 - core index']
  #allocation1 [shape = 'u32[144,128]{1,0:T(1,128)}', space=vmem, size = 0x12000, scoped, tag = 'internal scratch']
  %s0 = inlined_call_operand.vmem [shape: bf16[2,2,16,64], index: 0, kind: input, shape index: {}]
  %s1 = inlined_call_operand.vmem [shape: bf16[8,32], index: 1, kind: input, shape index: {}]
  %s2 = inlined_call_operand.vmem [shape: f32[8,1], index: 2, kind: input, shape index: {}]
  %s3 = inlined_call_operand.vmem [shape: f32[2,8,64], index: 3, kind: output, shape index: {}]
  %s4 = sld [smem:[#allocation0]]
  $region45: #{_lambda_.4} parent=0
    _
  %s6 = ssub.s32 1, %s4
  %s7 = scalar_select 0, %s6, %s4
  loop: start=0, step=1, limit=4
  $region2: #{_lambda_.4} parent=0 // loop_pre_header
    _
  $region3: #{_lambda_.4} parent=0 // loop_header
    %s9 = sphi 0, %s13
    %p10 = scmp.ge.s32.totalorder %s9, 4
    %s16 = sphi 0, %s35
    %s17 = sphi 0, %s31
    %s18 = sphi 0, %s27
    %s19 = sphi 0, %s16
    %s20 = sphi 0, %s17
    %s21 = sphi 0, %s18
    %s22 = sphi 0, %s19
    %s23 = sphi 0, %s20
    %s24 = sphi 0, %s21
    %s38 = sphi 0, %s40
    %s41 = sphi 0, %s38
    %s42 = sphi 0, %s41
    %s58 = sphi 0, %s42
    %s64 = sphi 0, %s66
    %s67 = sphi 0, %s64
    %s68 = sphi 0, %s67
    %s84 = sphi 0, %s68
    %s90 = sphi 0, %s92
    %s93 = sphi 0, %s90
    %s94 = sphi 0, %s93
    %s110 = sphi 0, %s94
    %s120 = sphi 0, %s122
    %s123 = sphi 0, %s120
    %s124 = sphi 0, %s123
    %s140 = sphi 0, %s124
  $region4: #{_lambda_.4} parent=0 // loop_header_branch
    %12 = sbr.rel (%p10) target = $region8
  $region5: #{_lambda_.4} parent=0 // loop_body
    %s14 = ssub.s32 %s9, 1
    %s15 = ssub.s32 %s9, 2
    %s25 = sadd.s32 1, %s18
    %p26 = scmp.ge.s32.totalorder %s25, 1
    %s27 = scalar_select %p26, 0, %s25
    %s28 = sadd.s32 1, %s17
    %s29 = scalar_select %p26, %s28, %s17
    %p30 = scmp.ge.s32.totalorder %s29, 1
    %s31 = scalar_select %p30, 0, %s29
    %s32 = sadd.s32 1, %s16
    %s33 = scalar_select %p30, %s32, %s16
    %p34 = scmp.ge.s32.totalorder %s33, 2
    %s35 = scalar_select %p34, 0, %s33
    %s36 = ssub.s32 %s16, %s35
    %p37 = scmp.eq.s32.totalorder %s36, 0
    %s39 = sadd.s32 %s38, 1
    %s40 = scalar_select %p37, %s38, %s39
    %p43 = pneg %p37
    %p44 = scmp.eq.s32.totalorder %s9, 1
    %p45 = por %p43, %p44
    %p46 = scmp.ne.s32.totalorder %s38, %s41
    %p47 = scmp.eq.s32.totalorder %s9, 0
    %p48 = por %p46, %p47
    %p49 = scmp.ne.s32.totalorder %s38, %s41
    %p50 = scmp.eq.s32.totalorder %s14, 1
    %p51 = por %p49, %p50
    %p52 = scmp.ne.s32.totalorder %s41, %s42
    %p53 = scmp.eq.s32.totalorder %s14, 0
    %p54 = por %p52, %p53
    %p55 = scmp.ne.s32.totalorder %s41, %s42
    %p56 = scmp.eq.s32.totalorder %s15, 1
    %p57 = por %p55, %p56
    %p59 = scmp.ne.s32.totalorder %s42, %s58
    %p60 = scmp.eq.s32.totalorder %s15, 0
    %p61 = por %p59, %p60
    %s62 = ssub.s32 %s17, %s31
    %p63 = scmp.eq.s32.totalorder %s62, 0
    %s65 = sadd.s32 %s64, 1
    %s66 = scalar_select %p63, %s64, %s65
    %p69 = pneg %p63
    %p70 = scmp.eq.s32.totalorder %s9, 1
    %p71 = por %p69, %p70
    %p72 = scmp.ne.s32.totalorder %s64, %s67
    %p73 = scmp.eq.s32.totalorder %s9, 0
    %p74 = por %p72, %p73
    %p75 = scmp.ne.s32.totalorder %s64, %s67
    %p76 = scmp.eq.s32.totalorder %s14, 1
    %p77 = por %p75, %p76
    %p78 = scmp.ne.s32.totalorder %s67, %s68
    %p79 = scmp.eq.s32.totalorder %s14, 0
    %p80 = por %p78, %p79
    %p81 = scmp.ne.s32.totalorder %s67, %s68
    %p82 = scmp.eq.s32.totalorder %s15, 1
    %p83 = por %p81, %p82
    %p85 = scmp.ne.s32.totalorder %s68, %s84
    %p86 = scmp.eq.s32.totalorder %s15, 0
    %p87 = por %p85, %p86
    %s88 = ssub.s32 %s17, %s31
    %p89 = scmp.eq.s32.totalorder %s88, 0
    %s91 = sadd.s32 %s90, 1
    %s92 = scalar_select %p89, %s90, %s91
    %p95 = pneg %p89
    %p96 = scmp.eq.s32.totalorder %s9, 1
    %p97 = por %p95, %p96
    %p98 = scmp.ne.s32.totalorder %s90, %s93
    %p99 = scmp.eq.s32.totalorder %s9, 0
    %p100 = por %p98, %p99
    %p101 = scmp.ne.s32.totalorder %s90, %s93
    %p102 = scmp.eq.s32.totalorder %s14, 1
    %p103 = por %p101, %p102
    %p104 = scmp.ne.s32.totalorder %s93, %s94
    %p105 = scmp.eq.s32.totalorder %s14, 0
    %p106 = por %p104, %p105
    %p107 = scmp.ne.s32.totalorder %s93, %s94
    %p108 = scmp.eq.s32.totalorder %s15, 1
    %p109 = por %p107, %p108
    %p111 = scmp.ne.s32.totalorder %s94, %s110
    %p112 = scmp.eq.s32.totalorder %s15, 0
    %p113 = por %p111, %p112
    %s114 = ssub.s32 %s16, %s35
    %s115 = ssub.s32 %s17, %s31
    %s116 = sor.u32 %s114, %s115
    %s117 = ssub.s32 %s18, %s27
    %s118 = sor.u32 %s116, %s117
    %p119 = scmp.eq.s32.totalorder %s118, 0
    %s121 = sadd.s32 %s120, 1
    %s122 = scalar_select %p119, %s120, %s121
    %p125 = pneg %p119
    %p126 = scmp.eq.s32.totalorder %s9, 1
    %p127 = por %p125, %p126
    %p128 = scmp.ne.s32.totalorder %s120, %s123
    %p129 = scmp.eq.s32.totalorder %s9, 0
    %p130 = por %p128, %p129
    %p131 = scmp.ne.s32.totalorder %s120, %s123
    %p132 = scmp.eq.s32.totalorder %s14, 1
    %p133 = por %p131, %p132
    %p134 = scmp.ne.s32.totalorder %s123, %s124
    %p135 = scmp.eq.s32.totalorder %s14, 0
    %p136 = por %p134, %p135
    %p137 = scmp.ne.s32.totalorder %s123, %s124
    %p138 = scmp.eq.s32.totalorder %s15, 1
    %p139 = por %p137, %p138
    %p141 = scmp.ne.s32.totalorder %s124, %s140
    %p142 = scmp.eq.s32.totalorder %s15, 0
    %p143 = por %p141, %p142
    %p144 = scmp.le.s32.totalorder 1, %s9
    %p145 = scmp.lt.s32.totalorder %s9, 3
    %p146 = pnand %p144, %p145
    %p147 = pneg %p146
    // Predicated region
    $region9: #{_lambda_.4} parent=5 // pred_check
      _
    $region10: #{_lambda_.4} parent=5 // pred_check_branch
      %149 = sbr.rel (%p146) target = $region12
    $region11: #{_lambda_.4} parent=5 // pred_region
      %s150 = ssub.s32 %s9, 1
      // Predicated region
      $region13: #{_lambda_.4} parent=11 // pred_check
        %p151 = pneg %p80
      $region14: #{_lambda_.4} parent=11 // pred_check_branch
        %153 = sbr.rel (%p151) target = $region16
      $region15: #{_lambda_.4} parent=11 // pred_region
        %p154 = scmp.lt.s32.totalorder %s20, 0
        %s155 = scalar_select %p154, %s20, 0
        %s156 = smul.addr %s155, 4
        %s157 = scalar_lea.vmem %s1, %s156
      $region16: #{_lambda_.4} parent=11 // pred_fallthru
        _
      // Predicated region
      $region17: #{_lambda_.4} parent=11 // pred_check
        %p158 = pneg %p106
      $region18: #{_lambda_.4} parent=11 // pred_check_branch
        %160 = sbr.rel (%p158) target = $region20
      $region19: #{_lambda_.4} parent=11 // pred_region
        %p161 = scmp.lt.s32.totalorder %s20, 0
        %s162 = scalar_select %p161, %s20, 0
        %s163 = smul.addr %s162, 8
        %s164 = scalar_lea.vmem %s2, %s163
      $region20: #{_lambda_.4} parent=11 // pred_fallthru
        _
    $region12: #{_lambda_.4} parent=5 // pred_fallthru
      _
    %p165 = scmp.lt.s32.totalorder %s9, 2
    // Predicated region
    $region21: #{_lambda_.4} parent=5 // pred_check
      %p166 = pneg %p165
    $region22: #{_lambda_.4} parent=5 // pred_check_branch
      %168 = sbr.rel (%p166) target = $region24
    $region23: #{_lambda_.4} parent=5 // pred_region
      // Predicated region
      $region25: #{_lambda_.4} parent=23 // pred_check
        %p169 = pneg %p48
      $region26: #{_lambda_.4} parent=23 // pred_check_branch
        %171 = sbr.rel (%p169) target = $region28
      $region27: #{_lambda_.4} parent=23 // pred_region
        %p172 = scmp.lt.s32.totalorder %s16, 1
        %s173 = scalar_select %p172, %s16, 1
        %s174 = smul.addr %s173, 4
        %s175 = smul.addr %s174, 4
        %s176 = scalar_lea.vmem %s0, %s175
      $region28: #{_lambda_.4} parent=23 // pred_fallthru
        _
    $region24: #{_lambda_.4} parent=5 // pred_fallthru
      _
    %p177 = scmp.le.s32.totalorder 1, %s9
    %p178 = scmp.lt.s32.totalorder %s9, 3
    %p179 = pnand %p177, %p178
    %p180 = pneg %p179
    // Predicated region
    $region29: #{_lambda_.4} parent=5 // pred_check
      _
    $region30: #{_lambda_.4} parent=5 // pred_check_branch
      %182 = sbr.rel (%p179) target = $region32
    $region31: #{_lambda_.4} parent=5 // pred_region
      %s183 = ssub.s32 %s9, 1
      %p184 = scmp.lt.s32.totalorder %s19, 1
      %s185 = scalar_select %p184, %s19, 1
      %s186 = smul.addr %s185, 4
      %s187 = smul.addr %s186, 4
      %s188 = scalar_lea.vmem %s0, %s187
      %p189 = pneg %p54
      %p190 = pneg %p51
      %p191 = scmp.lt.s32.totalorder %s20, 0
      %s192 = scalar_select %p191, %s20, 0
      %s193 = smul.addr %s192, 4
      %s194 = scalar_lea.vmem %s1, %s193
      %p195 = pneg %p80
      %p196 = pneg %p77
      %p197 = scmp.lt.s32.totalorder %s20, 0
      %s198 = scalar_select %p197, %s20, 0
      %s199 = smul.addr %s198, 8
      %s200 = scalar_lea.vmem %s2, %s199
      %p201 = pneg %p106
      %p202 = pneg %p103
      %p203 = pneg %p136
      %p204 = pneg %p133
      %p205 = scmp.lt.s32.totalorder %s19, 1
      %s206 = scalar_select %p205, %s19, 1
      %p207 = scmp.lt.s32.totalorder %s20, 0
      %s208 = scalar_select %p207, %s20, 0
      %p209 = scmp.lt.s32.totalorder %s21, 0
      %s210 = scalar_select %p209, %s21, 0
      %s211 = sadd.s32 %s210, %s208
      %s212 = sadd.s32 %s211, %s206
      %s213 = smul.addr %s212, 8
      %s214 = scalar_lea.vmem %s3, %s213
      %p215 = scmp.lt.s32.totalorder %s19, 1
      %s216 = scalar_select %p215, %s19, 1
      %s217 = smul.addr %s216, 4
      %s218 = smul.addr %s217, 4
      %s219 = scalar_lea.vmem %s0, %s218
      %p220 = scmp.lt.s32.totalorder %s20, 0
      %s221 = scalar_select %p220, %s20, 0
      %s222 = smul.addr %s221, 4
      %s223 = scalar_lea.vmem %s1, %s222
      %p224 = scmp.lt.s32.totalorder %s20, 0
      %s225 = scalar_select %p224, %s20, 0
      %s226 = smul.addr %s225, 8
      %s227 = scalar_lea.vmem %s2, %s226
      %p228 = scmp.lt.s32.totalorder %s19, 1
      %s229 = scalar_select %p228, %s19, 1
      %p230 = scmp.lt.s32.totalorder %s20, 0
      %s231 = scalar_select %p230, %s20, 0
      %p232 = scmp.lt.s32.totalorder %s21, 0
      %s233 = scalar_select %p232, %s21, 0
      %s234 = sadd.s32 %s233, %s231
      %s235 = sadd.s32 %s234, %s229
      %s236 = smul.addr %s235, 8
      %s237 = scalar_lea.vmem %s3, %s236
      %v239 = vld [vmem:[%s219] sm:$0xf]
      %v240 = vld [vmem:[%s219 + $0x4] sm:$0xf]
      %s241 = scalar_lea.vmem %s219, 8
      %v242 = vld [vmem:[%s241] sm:$0xf]
      %v243 = vld [vmem:[%s241 + $0x4] sm:$0xf]
      %v246 = vunpack.c.l.b16 %v239
      %v247 = vunpack.c.l.b16 %v240
      %v248 = vpack.c.b16 %v247, %v246
      %v252 = vunpack.c.l.b16 %v242
      %v253 = vunpack.c.l.b16 %v243
      %v254 = vpack.c.b16 %v253, %v252
      %v256 = vld [vmem:[%s223] sm:$0xf]
      %v257 = vld [vmem:[%s227] sm:$0xff]
      %259 = vset.pattern.permute.xlu0 0
      %260 = vperm.xlu0 %259, %v257
      %v261 = vpop.permute.xlu0 %260
      %vm263 = vcmask 261120
      %v265 = vsel %vm263, %v256, 0
      %267 = vmatprep.subr.bf16.mxu0 0
      %268 = vmatpush1.bf16.msra.mxu0 %v248
      %269 = vmatprep.subr.bf16.mxu0 0
      %270 = vmatpush1.bf16.msra.mxu0 %v254
      %271 = vmatprep.subr.bf16.mxu0 0
      %272 = vmatpush1.bf16.msra.mxu0 0
      %273 = vmatprep.subr.bf16.mxu0 0
      %274 = vmatpush1.bf16.msra.mxu0 0
      %275 = vmatprep.subr.bf16.mxu0 0
      %276 = vmatpush1.bf16.msra.mxu0 0
      %277 = vmatprep.subr.bf16.mxu0 0
      %278 = vmatpush1.bf16.msra.mxu0 0
      %279 = vmatprep.subr.bf16.mxu0 0
      %280 = vmatpush1.bf16.msra.mxu0 0
      %281 = vmatprep.subr.bf16.mxu0 0
      %282 = vmatpush1.bf16.msra.mxu0 0
      %283 = vmatprep.subr.bf16.mxu0 0
      %284 = vmatpush1.bf16.msra.mxu0 0
      %285 = vmatprep.subr.bf16.mxu0 0
      %286 = vmatpush1.bf16.msra.mxu0 0
      %287 = vmatprep.subr.bf16.mxu0 0
      %288 = vmatpush1.bf16.msra.mxu0 0
      %289 = vmatprep.subr.bf16.mxu0 0
      %290 = vmatpush1.bf16.msra.mxu0 0
      %291 = vmatprep.subr.bf16.mxu0 0
      %292 = vmatpush1.bf16.msra.mxu0 0
      %293 = vmatprep.subr.bf16.mxu0 0
      %294 = vmatpush1.bf16.msra.mxu0 0
      %295 = vmatprep.subr.bf16.mxu0 0
      %296 = vmatpush1.bf16.msra.mxu0 0
      %297 = vmatprep.subr.bf16.mxu0 0
      %298 = vmatpush1.bf16.msra.mxu0 0
      %299 = vmatprep.mubr.bf16.mxu0 0
      %300 = vmatmul.mubr.bf16.gmra.mrb[0].mxu0 %v265
      %v301 = vpop.f32.mrb[0].mxu0
      %v302 = vadd.f32 %v261, %v301
      %v303 = vpop.f32.mrb[0].mxu0
      %v304 = vpop.f32.mrb[0].mxu0
      %v305 = vpop.f32.mrb[0].mxu0
      %306 = vdwg.mxu0
      %vm307 = vcmask 523264
      %308 = vst.msk [vmem:[%s237] sm:$0xff] %vm307, %v302
      %p309 = scmp.lt.s32.totalorder %s19, 1
      %s310 = scalar_select %p309, %s19, 1
      %p311 = scmp.lt.s32.totalorder %s20, 0
      %s312 = scalar_select %p311, %s20, 0
      %p313 = scmp.lt.s32.totalorder %s21, 0
      %s314 = scalar_select %p313, %s21, 0
      %s315 = sadd.s32 %s314, %s312
      %s316 = sadd.s32 %s315, %s310
      %s317 = smul.addr %s316, 8
      %s318 = scalar_lea.vmem %s3, %s317
      // Predicated region
      $region33: #{_lambda_.4} parent=31 // pred_check
        %p319 = pneg %p133
      $region34: #{_lambda_.4} parent=31 // pred_check_branch
        %321 = sbr.rel (%p319) target = $region36
      $region35: #{_lambda_.4} parent=31 // pred_region
        _
      $region36: #{_lambda_.4} parent=31 // pred_fallthru
        _
    $region32: #{_lambda_.4} parent=5 // pred_fallthru
      _
    %p322 = scmp.le.s32.totalorder 2, %s9
    // Predicated region
    $region37: #{_lambda_.4} parent=5 // pred_check
      %p323 = pneg %p322
    $region38: #{_lambda_.4} parent=5 // pred_check_branch
      %325 = sbr.rel (%p323) target = $region40
    $region39: #{_lambda_.4} parent=5 // pred_region
      %s326 = ssub.s32 %s9, 2
      // Predicated region
      $region41: #{_lambda_.4} parent=39 // pred_check
        %p327 = pneg %p139
      $region42: #{_lambda_.4} parent=39 // pred_check_branch
        %329 = sbr.rel (%p327) target = $region44
      $region43: #{_lambda_.4} parent=39 // pred_region
        %p330 = scmp.lt.s32.totalorder %s22, 1
        %s331 = scalar_select %p330, %s22, 1
        %p332 = scmp.lt.s32.totalorder %s23, 0
        %s333 = scalar_select %p332, %s23, 0
        %p334 = scmp.lt.s32.totalorder %s24, 0
        %s335 = scalar_select %p334, %s24, 0
        %s336 = sadd.s32 %s335, %s333
        %s337 = sadd.s32 %s336, %s331
        %s338 = smul.addr %s337, 8
        %s339 = scalar_lea.vmem %s3, %s338
      $region44: #{_lambda_.4} parent=39 // pred_fallthru
        _
    $region40: #{_lambda_.4} parent=5 // pred_fallthru
      _
  $region6: #{_lambda_.4} parent=0 // loop_footer
    %s13 = sadd.s32 1, %s9
  $region7: #{_lambda_.4} parent=0 // loop_footer_branch
    %8 = sbr.rel target = $region3
  $region8: #{_lambda_.4} parent=0 // loop_exit
    _

// kernel: _lambda_.3
$region0: #{_lambda_.3}
  #allocation0 [shape = 'u32[]', space=smem, size = 0x4, offset = 0x4, fixed_abs, tag = 'smem constant byte address 0x4 - core index']
  #allocation1 [shape = 'u32[144,128]{1,0:T(1,128)}', space=vmem, size = 0x12000, scoped, tag = 'internal scratch']
  %s0 = inlined_call_operand.vmem [shape: bf16[2,1,16,96], index: 0, kind: input, shape index: {}]
  %s1 = inlined_call_operand.vmem [shape: bf16[8,48], index: 1, kind: input, shape index: {}]
  %s2 = inlined_call_operand.vmem [shape: f32[8,1], index: 2, kind: input, shape index: {}]
  %s3 = inlined_call_operand.vmem [shape: f32[2,8,64], index: 3, kind: output, shape index: {}]
  %s4 = sld [smem:[#allocation0]]
  $region45: #{_lambda_.3} parent=0
    _
  %s6 = ssub.s32 1, %s4
  %s7 = scalar_select 0, %s6, %s4
  loop: start=0, step=1, limit=4
  $region2: #{_lambda_.3} parent=0 // loop_pre_header
    _
  $region3: #{_lambda_.3} parent=0 // loop_header
    %s9 = sphi 0, %s13
    %p10 = scmp.ge.s32.totalorder %s9, 4
    %s16 = sphi 0, %s35
    %s17 = sphi 0, %s31
    %s18 = sphi 0, %s27
    %s19 = sphi 0, %s16
    %s20 = sphi 0, %s17
    %s21 = sphi 0, %s18
    %s22 = sphi 0, %s19
    %s23 = sphi 0, %s20
    %s24 = sphi 0, %s21
    %s38 = sphi 0, %s40
    %s41 = sphi 0, %s38
    %s42 = sphi 0, %s41
    %s58 = sphi 0, %s42
    %s64 = sphi 0, %s66
    %s67 = sphi 0, %s64
    %s68 = sphi 0, %s67
    %s84 = sphi 0, %s68
    %s90 = sphi 0, %s92
    %s93 = sphi 0, %s90
    %s94 = sphi 0, %s93
    %s110 = sphi 0, %s94
    %s120 = sphi 0, %s122
    %s123 = sphi 0, %s120
    %s124 = sphi 0, %s123
    %s140 = sphi 0, %s124
  $region4: #{_lambda_.3} parent=0 // loop_header_branch
    %12 = sbr.rel (%p10) target = $region8
  $region5: #{_lambda_.3} parent=0 // loop_body
    %s14 = ssub.s32 %s9, 1
    %s15 = ssub.s32 %s9, 2
    %s25 = sadd.s32 1, %s18
    %p26 = scmp.ge.s32.totalorder %s25, 1
    %s27 = scalar_select %p26, 0, %s25
    %s28 = sadd.s32 1, %s17
    %s29 = scalar_select %p26, %s28, %s17
    %p30 = scmp.ge.s32.totalorder %s29, 1
    %s31 = scalar_select %p30, 0, %s29
    %s32 = sadd.s32 1, %s16
    %s33 = scalar_select %p30, %s32, %s16
    %p34 = scmp.ge.s32.totalorder %s33, 2
    %s35 = scalar_select %p34, 0, %s33
    %s36 = ssub.s32 %s16, %s35
    %p37 = scmp.eq.s32.totalorder %s36, 0
    %s39 = sadd.s32 %s38, 1
    %s40 = scalar_select %p37, %s38, %s39
    %p43 = pneg %p37
    %p44 = scmp.eq.s32.totalorder %s9, 1
    %p45 = por %p43, %p44
    %p46 = scmp.ne.s32.totalorder %s38, %s41
    %p47 = scmp.eq.s32.totalorder %s9, 0
    %p48 = por %p46, %p47
    %p49 = scmp.ne.s32.totalorder %s38, %s41
    %p50 = scmp.eq.s32.totalorder %s14, 1
    %p51 = por %p49, %p50
    %p52 = scmp.ne.s32.totalorder %s41, %s42
    %p53 = scmp.eq.s32.totalorder %s14, 0
    %p54 = por %p52, %p53
    %p55 = scmp.ne.s32.totalorder %s41, %s42
    %p56 = scmp.eq.s32.totalorder %s15, 1
    %p57 = por %p55, %p56
    %p59 = scmp.ne.s32.totalorder %s42, %s58
    %p60 = scmp.eq.s32.totalorder %s15, 0
    %p61 = por %p59, %p60
    %s62 = ssub.s32 %s17, %s31
    %p63 = scmp.eq.s32.totalorder %s62, 0
    %s65 = sadd.s32 %s64, 1
    %s66 = scalar_select %p63, %s64, %s65
    %p69 = pneg %p63
    %p70 = scmp.eq.s32.totalorder %s9, 1
    %p71 = por %p69, %p70
    %p72 = scmp.ne.s32.totalorder %s64, %s67
    %p73 = scmp.eq.s32.totalorder %s9, 0
    %p74 = por %p72, %p73
    %p75 = scmp.ne.s32.totalorder %s64, %s67
    %p76 = scmp.eq.s32.totalorder %s14, 1
    %p77 = por %p75, %p76
    %p78 = scmp.ne.s32.totalorder %s67, %s68
    %p79 = scmp.eq.s32.totalorder %s14, 0
    %p80 = por %p78, %p79
    %p81 = scmp.ne.s32.totalorder %s67, %s68
    %p82 = scmp.eq.s32.totalorder %s15, 1
    %p83 = por %p81, %p82
    %p85 = scmp.ne.s32.totalorder %s68, %s84
    %p86 = scmp.eq.s32.totalorder %s15, 0
    %p87 = por %p85, %p86
    %s88 = ssub.s32 %s17, %s31
    %p89 = scmp.eq.s32.totalorder %s88, 0
    %s91 = sadd.s32 %s90, 1
    %s92 = scalar_select %p89, %s90, %s91
    %p95 = pneg %p89
    %p96 = scmp.eq.s32.totalorder %s9, 1
    %p97 = por %p95, %p96
    %p98 = scmp.ne.s32.totalorder %s90, %s93
    %p99 = scmp.eq.s32.totalorder %s9, 0
    %p100 = por %p98, %p99
    %p101 = scmp.ne.s32.totalorder %s90, %s93
    %p102 = scmp.eq.s32.totalorder %s14, 1
    %p103 = por %p101, %p102
    %p104 = scmp.ne.s32.totalorder %s93, %s94
    %p105 = scmp.eq.s32.totalorder %s14, 0
    %p106 = por %p104, %p105
    %p107 = scmp.ne.s32.totalorder %s93, %s94
    %p108 = scmp.eq.s32.totalorder %s15, 1
    %p109 = por %p107, %p108
    %p111 = scmp.ne.s32.totalorder %s94, %s110
    %p112 = scmp.eq.s32.totalorder %s15, 0
    %p113 = por %p111, %p112
    %s114 = ssub.s32 %s16, %s35
    %s115 = ssub.s32 %s17, %s31
    %s116 = sor.u32 %s114, %s115
    %s117 = ssub.s32 %s18, %s27
    %s118 = sor.u32 %s116, %s117
    %p119 = scmp.eq.s32.totalorder %s118, 0
    %s121 = sadd.s32 %s120, 1
    %s122 = scalar_select %p119, %s120, %s121
    %p125 = pneg %p119
    %p126 = scmp.eq.s32.totalorder %s9, 1
    %p127 = por %p125, %p126
    %p128 = scmp.ne.s32.totalorder %s120, %s123
    %p129 = scmp.eq.s32.totalorder %s9, 0
    %p130 = por %p128, %p129
    %p131 = scmp.ne.s32.totalorder %s120, %s123
    %p132 = scmp.eq.s32.totalorder %s14, 1
    %p133 = por %p131, %p132
    %p134 = scmp.ne.s32.totalorder %s123, %s124
    %p135 = scmp.eq.s32.totalorder %s14, 0
    %p136 = por %p134, %p135
    %p137 = scmp.ne.s32.totalorder %s123, %s124
    %p138 = scmp.eq.s32.totalorder %s15, 1
    %p139 = por %p137, %p138
    %p141 = scmp.ne.s32.totalorder %s124, %s140
    %p142 = scmp.eq.s32.totalorder %s15, 0
    %p143 = por %p141, %p142
    %p144 = scmp.le.s32.totalorder 1, %s9
    %p145 = scmp.lt.s32.totalorder %s9, 3
    %p146 = pnand %p144, %p145
    %p147 = pneg %p146
    // Predicated region
    $region9: #{_lambda_.3} parent=5 // pred_check
      _
    $region10: #{_lambda_.3} parent=5 // pred_check_branch
      %149 = sbr.rel (%p146) target = $region12
    $region11: #{_lambda_.3} parent=5 // pred_region
      %s150 = ssub.s32 %s9, 1
      // Predicated region
      $region13: #{_lambda_.3} parent=11 // pred_check
        %p151 = pneg %p80
      $region14: #{_lambda_.3} parent=11 // pred_check_branch
        %153 = sbr.rel (%p151) target = $region16
      $region15: #{_lambda_.3} parent=11 // pred_region
        %p154 = scmp.lt.s32.totalorder %s20, 0
        %s155 = scalar_select %p154, %s20, 0
        %s156 = smul.addr %s155, 4
        %s157 = scalar_lea.vmem %s1, %s156
      $region16: #{_lambda_.3} parent=11 // pred_fallthru
        _
      // Predicated region
      $region17: #{_lambda_.3} parent=11 // pred_check
        %p158 = pneg %p106
      $region18: #{_lambda_.3} parent=11 // pred_check_branch
        %160 = sbr.rel (%p158) target = $region20
      $region19: #{_lambda_.3} parent=11 // pred_region
        %p161 = scmp.lt.s32.totalorder %s20, 0
        %s162 = scalar_select %p161, %s20, 0
        %s163 = smul.addr %s162, 8
        %s164 = scalar_lea.vmem %s2, %s163
      $region20: #{_lambda_.3} parent=11 // pred_fallthru
        _
    $region12: #{_lambda_.3} parent=5 // pred_fallthru
      _
    %p165 = scmp.lt.s32.totalorder %s9, 2
    // Predicated region
    $region21: #{_lambda_.3} parent=5 // pred_check
      %p166 = pneg %p165
    $region22: #{_lambda_.3} parent=5 // pred_check_branch
      %168 = sbr.rel (%p166) target = $region24
    $region23: #{_lambda_.3} parent=5 // pred_region
      // Predicated region
      $region25: #{_lambda_.3} parent=23 // pred_check
        %p169 = pneg %p48
      $region26: #{_lambda_.3} parent=23 // pred_check_branch
        %171 = sbr.rel (%p169) target = $region28
      $region27: #{_lambda_.3} parent=23 // pred_region
        %p172 = scmp.lt.s32.totalorder %s16, 1
        %s173 = scalar_select %p172, %s16, 1
        %s174 = smul.addr %s173, 2
        %s175 = smul.addr %s174, 4
        %s176 = scalar_lea.vmem %s0, %s175
      $region28: #{_lambda_.3} parent=23 // pred_fallthru
        _
    $region24: #{_lambda_.3} parent=5 // pred_fallthru
      _
    %p177 = scmp.le.s32.totalorder 1, %s9
    %p178 = scmp.lt.s32.totalorder %s9, 3
    %p179 = pnand %p177, %p178
    %p180 = pneg %p179
    // Predicated region
    $region29: #{_lambda_.3} parent=5 // pred_check
      _
    $region30: #{_lambda_.3} parent=5 // pred_check_branch
      %182 = sbr.rel (%p179) target = $region32
    $region31: #{_lambda_.3} parent=5 // pred_region
      %s183 = ssub.s32 %s9, 1
      %p184 = scmp.lt.s32.totalorder %s19, 1
      %s185 = scalar_select %p184, %s19, 1
      %s186 = smul.addr %s185, 2
      %s187 = smul.addr %s186, 4
      %s188 = scalar_lea.vmem %s0, %s187
      %p189 = pneg %p54
      %p190 = pneg %p51
      %p191 = scmp.lt.s32.totalorder %s20, 0
      %s192 = scalar_select %p191, %s20, 0
      %s193 = smul.addr %s192, 4
      %s194 = scalar_lea.vmem %s1, %s193
      %p195 = pneg %p80
      %p196 = pneg %p77
      %p197 = scmp.lt.s32.totalorder %s20, 0
      %s198 = scalar_select %p197, %s20, 0
      %s199 = smul.addr %s198, 8
      %s200 = scalar_lea.vmem %s2, %s199
      %p201 = pneg %p106
      %p202 = pneg %p103
      %p203 = pneg %p136
      %p204 = pneg %p133
      %p205 = scmp.lt.s32.totalorder %s19, 1
      %s206 = scalar_select %p205, %s19, 1
      %p207 = scmp.lt.s32.totalorder %s20, 0
      %s208 = scalar_select %p207, %s20, 0
      %p209 = scmp.lt.s32.totalorder %s21, 0
      %s210 = scalar_select %p209, %s21, 0
      %s211 = sadd.s32 %s210, %s208
      %s212 = sadd.s32 %s211, %s206
      %s213 = smul.addr %s212, 8
      %s214 = scalar_lea.vmem %s3, %s213
      %p215 = scmp.lt.s32.totalorder %s19, 1
      %s216 = scalar_select %p215, %s19, 1
      %s217 = smul.addr %s216, 2
      %s218 = smul.addr %s217, 4
      %s219 = scalar_lea.vmem %s0, %s218
      %p220 = scmp.lt.s32.totalorder %s20, 0
      %s221 = scalar_select %p220, %s20, 0
      %s222 = smul.addr %s221, 4
      %s223 = scalar_lea.vmem %s1, %s222
      %p224 = scmp.lt.s32.totalorder %s20, 0
      %s225 = scalar_select %p224, %s20, 0
      %s226 = smul.addr %s225, 8
      %s227 = scalar_lea.vmem %s2, %s226
      %p228 = scmp.lt.s32.totalorder %s19, 1
      %s229 = scalar_select %p228, %s19, 1
      %p230 = scmp.lt.s32.totalorder %s20, 0
      %s231 = scalar_select %p230, %s20, 0
      %p232 = scmp.lt.s32.totalorder %s21, 0
      %s233 = scalar_select %p232, %s21, 0
      %s234 = sadd.s32 %s233, %s231
      %s235 = sadd.s32 %s234, %s229
      %s236 = smul.addr %s235, 8
      %s237 = scalar_lea.vmem %s3, %s236
      %v239 = vld [vmem:[%s219] sm:$0xf]
      %v240 = vld [vmem:[%s219 + $0x4] sm:$0xf]
      %v243 = vunpack.c.l.b16 %v239
      %v244 = vunpack.c.l.b16 %v240
      %v245 = vpack.c.b16 %v244, %v243
      %247 = vrot.lane.b32.xlu0 %v245, 112
      %v248 = vpop.permute.xlu0 %247
      %250 = vrot.lane.b32.xlu0 %v245, 96
      %v251 = vpop.permute.xlu0 %250
      %v253 = vld [vmem:[%s223] sm:$0xf]
      %v254 = vld [vmem:[%s227] sm:$0xff]
      %256 = vset.pattern.permute.xlu0 0
      %257 = vperm.xlu0 %256, %v254
      %v258 = vpop.permute.xlu0 %257
      %vm260 = vcmask 392192
      %v262 = vsel %vm260, %v253, 0
      %264 = vmatprep.subr.bf16.mxu0 0
      %265 = vmatpush1.bf16.msra.mxu0 %v245
      %266 = vmatprep.subr.bf16.mxu0 0
      %267 = vmatpush1.bf16.msra.mxu0 %v248
      %268 = vmatprep.subr.bf16.mxu0 0
      %269 = vmatpush1.bf16.msra.mxu0 %v251
      %270 = vmatprep.subr.bf16.mxu0 0
      %271 = vmatpush1.bf16.msra.mxu0 0
      %272 = vmatprep.subr.bf16.mxu0 0
      %273 = vmatpush1.bf16.msra.mxu0 0
      %274 = vmatprep.subr.bf16.mxu0 0
      %275 = vmatpush1.bf16.msra.mxu0 0
      %276 = vmatprep.subr.bf16.mxu0 0
      %277 = vmatpush1.bf16.msra.mxu0 0
      %278 = vmatprep.subr.bf16.mxu0 0
      %279 = vmatpush1.bf16.msra.mxu0 0
      %280 = vmatprep.subr.bf16.mxu0 0
      %281 = vmatpush1.bf16.msra.mxu0 0
      %282 = vmatprep.subr.bf16.mxu0 0
      %283 = vmatpush1.bf16.msra.mxu0 0
      %284 = vmatprep.subr.bf16.mxu0 0
      %285 = vmatpush1.bf16.msra.mxu0 0
      %286 = vmatprep.subr.bf16.mxu0 0
      %287 = vmatpush1.bf16.msra.mxu0 0
      %288 = vmatprep.subr.bf16.mxu0 0
      %289 = vmatpush1.bf16.msra.mxu0 0
      %290 = vmatprep.subr.bf16.mxu0 0
      %291 = vmatpush1.bf16.msra.mxu0 0
      %292 = vmatprep.subr.bf16.mxu0 0
      %293 = vmatpush1.bf16.msra.mxu0 0
      %294 = vmatprep.subr.bf16.mxu0 0
      %295 = vmatpush1.bf16.msra.mxu0 0
      %296 = vmatprep.mubr.bf16.mxu0 0
      %297 = vmatmul.mubr.bf16.gmra.mrb[0].mxu0 %v262
      %v298 = vpop.f32.mrb[0].mxu0
      %v299 = vadd.f32 %v258, %v298
      %v300 = vpop.f32.mrb[0].mxu0
      %v301 = vpop.f32.mrb[0].mxu0
      %v302 = vpop.f32.mrb[0].mxu0
      %303 = vdwg.mxu0
      %vm304 = vcmask 523264
      %305 = vst.msk [vmem:[%s237] sm:$0xff] %vm304, %v299
      %p306 = scmp.lt.s32.totalorder %s19, 1
      %s307 = scalar_select %p306, %s19, 1
      %p308 = scmp.lt.s32.totalorder %s20, 0
      %s309 = scalar_select %p308, %s20, 0
      %p310 = scmp.lt.s32.totalorder %s21, 0
      %s311 = scalar_select %p310, %s21, 0
      %s312 = sadd.s32 %s311, %s309
      %s313 = sadd.s32 %s312, %s307
      %s314 = smul.addr %s313, 8
      %s315 = scalar_lea.vmem %s3, %s314
      // Predicated region
      $region33: #{_lambda_.3} parent=31 // pred_check
        %p316 = pneg %p133
      $region34: #{_lambda_.3} parent=31 // pred_check_branch
        %318 = sbr.rel (%p316) target = $region36
      $region35: #{_lambda_.3} parent=31 // pred_region
        _
      $region36: #{_lambda_.3} parent=31 // pred_fallthru
        _
    $region32: #{_lambda_.3} parent=5 // pred_fallthru
      _
    %p319 = scmp.le.s32.totalorder 2, %s9
    // Predicated region
    $region37: #{_lambda_.3} parent=5 // pred_check
      %p320 = pneg %p319
    $region38: #{_lambda_.3} parent=5 // pred_check_branch
      %322 = sbr.rel (%p320) target = $region40
    $region39: #{_lambda_.3} parent=5 // pred_region
      %s323 = ssub.s32 %s9, 2
      // Predicated region
      $region41: #{_lambda_.3} parent=39 // pred_check
        %p324 = pneg %p139
      $region42: #{_lambda_.3} parent=39 // pred_check_branch
        %326 = sbr.rel (%p324) target = $region44
      $region43: #{_lambda_.3} parent=39 // pred_region
        %p327 = scmp.lt.s32.totalorder %s22, 1
        %s328 = scalar_select %p327, %s22, 1
        %p329 = scmp.lt.s32.totalorder %s23, 0
        %s330 = scalar_select %p329, %s23, 0
        %p331 = scmp.lt.s32.totalorder %s24, 0
        %s332 = scalar_select %p331, %s24, 0
        %s333 = sadd.s32 %s332, %s330
        %s334 = sadd.s32 %s333, %s328
        %s335 = smul.addr %s334, 8
        %s336 = scalar_lea.vmem %s3, %s335
      $region44: #{_lambda_.3} parent=39 // pred_fallthru
        _
    $region40: #{_lambda_.3} parent=5 // pred_fallthru
      _
  $region6: #{_lambda_.3} parent=0 // loop_footer
    %s13 = sadd.s32 1, %s9
  $region7: #{_lambda_.3} parent=0 // loop_footer_branch
    %8 = sbr.rel target = $region3
  $region8: #{_lambda_.3} parent=0 // loop_exit
    _

</llo_original>
